<compile_context>
chip_gen: v7x
topology: tpu7x:2x2x1
jax: 0.10.0
libtpu: 0.0.40
codegen_flags: <defaults>
</compile_context>

<pallas_src>
import functools

import jax
import jax.numpy as jnp
from jax.experimental import pallas as pl
from jax.experimental.pallas import tpu as pltpu

LANES = 128
SUBLANES = 8
DEFAULT_BLOCK_R = 4096  # rows per grid step (2 MiB f32 per input per block)


def _round_up(x, m):
    return ((x + m - 1) // m) * m


def _min_row_multiple(dtype):
    # Min sublane tile per dtype: f32 -> 8, bf16/f16 -> 16, int8/bool/fp8 -> 32.
    itemsize = jnp.dtype(dtype).itemsize
    return SUBLANES * max(1, 4 // max(1, itemsize))


def _bce_partial_kernel(x_ref, y_ref, out_ref, *, valid_rows, block_r):
    """Writes the (8,128) sublane-grouped partial BCE sum of this row block."""
    i = pl.program_id(0)
    nsteps = pl.num_programs(0)

    x = x_ref[...].astype(jnp.float32)
    y = y_ref[...].astype(jnp.float32)

    # Numerically-stable BCE-with-logits (same formula PyTorch uses):
    #   max(x, 0) - x*y + log(1 + exp(-|x|))
    bce = jnp.maximum(x, 0.0) - x * y + jnp.log1p(jnp.exp(-jnp.abs(x)))

    is_last = i == nsteps - 1

    # Bulk blocks: no mask, pure VPU sublane-grouped partial sum.
    @pl.when(jnp.logical_not(is_last))
    def _():
        out_ref[...] = bce.reshape(block_r // SUBLANES, SUBLANES, LANES).sum(axis=0)

    # Last block: mask out-of-bounds rows of the (possibly partial) edge block.
    @pl.when(is_last)
    def _():
        row = jax.lax.broadcasted_iota(jnp.int32, (block_r, 1), 0) + i * block_r
        b = jnp.where(row < valid_rows, bce, 0.0)  # NaN-safe for OOB garbage
        out_ref[...] = b.reshape(block_r // SUBLANES, SUBLANES, LANES).sum(axis=0)


def focal_loss_binary(output, target, focusing_param=5, balance_param=0.9,
                      block_r=None):
    """Pallas implementation of FocalLoss_binary.forward (reduction='mean')."""
    assert output.shape == target.shape
    total_n = output.size

    x = output.reshape(-1)
    y = target.reshape(-1)

    # Only pad when the element count is not lane-aligned (rare). Sentinel
    # values make the padded elements contribute exactly 0 to the BCE sum.
    rem = total_n % LANES
    if rem != 0:
        pad = LANES - rem
        x = jnp.pad(x, (0, pad), constant_values=-1e4)
        y = jnp.pad(y, (0, pad), constant_values=0)

    rows = x.size // LANES
    x2d = x.reshape(rows, LANES)
    y2d = y.reshape(rows, LANES)

    # Row-block size: honor the narrowest input dtype's min sublane tile.
    row_mult = max(_min_row_multiple(x2d.dtype), _min_row_multiple(y2d.dtype))
    if block_r is None:
        block_r = DEFAULT_BLOCK_R
    block_r = _round_up(min(block_r, _round_up(rows, row_mult)), row_mult)
    num_blocks = pl.cdiv(rows, block_r)

    kernel = functools.partial(
        _bce_partial_kernel, valid_rows=rows, block_r=block_r)

    partials = pl.pallas_call(
        kernel,
        out_shape=jax.ShapeDtypeStruct((num_blocks * SUBLANES, LANES),
                                       jnp.float32),
        grid_spec=pltpu.PrefetchScalarGridSpec(
            num_scalar_prefetch=0,
            grid=(num_blocks,),
            in_specs=[
                pl.BlockSpec((block_r, LANES), lambda i: (i, 0)),
                pl.BlockSpec((block_r, LANES), lambda i: (i, 0)),
            ],
            out_specs=pl.BlockSpec((SUBLANES, LANES), lambda i: (i, 0)),
        ),
        compiler_params=pltpu.CompilerParams(
            # Independent per-block partial sums -> shardable across the two
            # v7x TensorCores; harmless on single-TC v5e/v6e.
            dimension_semantics=("parallel",),
            # 32 MiB: >= every generation's default scoped limit, well under
            # physical VMEM everywhere; gives headroom for f32 temporaries
            # at block_r=4096 (and for block_r=8192 on v7x).
            vmem_limit_bytes=32 * 1024 * 1024,
        ),
    )(x2d, y2d)

    # Tiny scalar epilogue on the (num_blocks*8, 128) partial sums.
    mean_bce = jnp.sum(partials, dtype=jnp.float32) / jnp.float32(total_n)
    logpt = -mean_bce
    pt = jnp.exp(logpt)
    # NOTE: with an integer focusing_param this is a repeated multiply; a
    # float gamma would lower to exp(g*log(1-pt)), NaN at pt == 1.
    focal = -((1.0 - pt) ** focusing_param) * logpt
    return jnp.float32(balance_param) * focal


def _reference(output, target, focusing_param=5, balance_param=0.9):
    x = output.astype(jnp.float32)
    y = target.astype(jnp.float32)
    bce = jnp.maximum(x, 0.0) - x * y + jnp.log1p(jnp.exp(-jnp.abs(x)))
    logpt = -jnp.mean(bce)
    pt = jnp.exp(logpt)
    focal = -((1.0 - pt) ** focusing_param) * logpt
    return balance_param * focal


if __name__ == "__main__":
    key = jax.random.PRNGKey(0)

    # NCHW logits with per-pixel binary targets.
    cases = [
        # (shape, target dtype, block_r override)
        ((2, 4, 16, 16), jnp.float32, None),   # lane-aligned, single block
        ((4, 8, 96, 96), jnp.float32, 512),    # multi-block grid + masked tail
        ((2, 3, 5, 7),   jnp.float32, None),   # non-128-aligned tail (sentinel pad)
        ((2, 4, 16, 16), jnp.bfloat16, None),  # narrow-dtype target path
    ]

    for shape, tgt_dtype, blk in cases:
        key, k1, k2 = jax.random.split(key, 3)
        x = jax.random.normal(k1, shape, dtype=jnp.float32)
        t = (jax.random.uniform(k2, shape) > 0.5).astype(tgt_dtype)

        loss = focal_loss_binary(x, t, focusing_param=5, balance_param=0.9,
                                 block_r=blk)
        loss = jax.block_until_ready(loss)

        ref = _reference(x, t.astype(jnp.float32),
                         focusing_param=5, balance_param=0.9)
        assert jnp.allclose(loss, ref, rtol=1e-5, atol=1e-6), (shape, loss, ref)

    print("KERNEL_OK")
</pallas_src>

<mosaic_0001>
module attributes {stable_mosaic.version = 11 : i64} {
  func.func @_bce_partial_kernel(%arg0: i32, %arg1: memref<16x128xf32, #tpu.memory_space<vmem>>, %arg2: memref<16x128xf32, #tpu.memory_space<vmem>>, %arg3: memref<8x128xf32, #tpu.memory_space<vmem>>) attributes {dimension_semantics = [#tpu.dimension_semantics<parallel>], iteration_bounds = array<i64: 1>, scalar_prefetch = 0 : i64, scratch_operands = 0 : i64, tpu.core_type = #tpu.core_type<tc>, window_params = [{transform_indices = @transform_0, window_bounds = array<i64: 16, 128>}, {transform_indices = @transform_1, window_bounds = array<i64: 16, 128>}, {transform_indices = @transform_2, window_bounds = array<i64: 8, 128>}]} {
    %c0 = arith.constant 0 : index
    %c0_0 = arith.constant 0 : index
    %0 = vector.load %arg1[%c0, %c0_0] : memref<16x128xf32, #tpu.memory_space<vmem>>, vector<16x128xf32>
    %c0_1 = arith.constant 0 : index
    %c0_2 = arith.constant 0 : index
    %1 = vector.load %arg2[%c0_1, %c0_2] : memref<16x128xf32, #tpu.memory_space<vmem>>, vector<16x128xf32>
    %cst = arith.constant 0.000000e+00 : f32
    %2 = vector.broadcast %cst : f32 to vector<16x128xf32>
    %3 = arith.maximumf %0, %2 : vector<16x128xf32>
    %4 = arith.mulf %0, %1 : vector<16x128xf32>
    %5 = arith.subf %3, %4 : vector<16x128xf32>
    %6 = math.absf %0 : vector<16x128xf32>
    %cst_3 = arith.constant 0.000000e+00 : f32
    %7 = vector.broadcast %cst_3 : f32 to vector<16x128xf32>
    %8 = arith.subf %7, %6 : vector<16x128xf32>
    %9 = math.exp %8 : vector<16x128xf32>
    %10 = math.log1p %9 : vector<16x128xf32>
    %11 = arith.addf %5, %10 : vector<16x128xf32>
    %c0_i32 = arith.constant 0 : i32
    %12 = arith.cmpi eq, %arg0, %c0_i32 : i32
    %true = arith.constant true
    %13 = arith.xori %12, %true : i1
    %14 = arith.extui %13 : i1 to i32
    %c0_i32_4 = arith.constant 0 : i32
    %15 = arith.cmpi ne, %14, %c0_i32_4 : i32
    scf.if %15 {
      %18 = vector.shape_cast %11 : vector<16x128xf32> to vector<2x8x128xf32>
      %cst_6 = arith.constant dense<0.000000e+00> : vector<8x128xf32>
      %19 = vector.multi_reduction <add>, %18, %cst_6 [0] : vector<2x8x128xf32> to vector<8x128xf32>
      %c0_7 = arith.constant 0 : index
      %c0_8 = arith.constant 0 : index
      %20 = vector.load %arg3[%c0_7, %c0_8] : memref<8x128xf32, #tpu.memory_space<vmem>>, vector<8x128xf32>
      tpu.vector_store %arg3[%c0_7, %c0_8], %19 {strides = array<i32>} : memref<8x128xf32, #tpu.memory_space<vmem>>, vector<8x128xf32>,
    } else {
    }
    %16 = arith.extui %12 : i1 to i32
    %c0_i32_5 = arith.constant 0 : i32
    %17 = arith.cmpi ne, %16, %c0_i32_5 : i32
    scf.if %17 {
      %18 = tpu.iota {dimensions = array<i32: 0>} : vector<16x1xi32>
      %c16_i32 = arith.constant 16 : i32
      %19 = arith.muli %arg0, %c16_i32 : i32
      %20 = vector.broadcast %19 : i32 to vector<16x1xi32>
      %21 = arith.addi %18, %20 : vector<16x1xi32>
      %c16_i32_6 = arith.constant 16 : i32
      %22 = vector.broadcast %c16_i32_6 : i32 to vector<16x1xi32>
      %23 = arith.cmpi slt, %21, %22 : vector<16x1xi32>
      %cst_7 = arith.constant 0.000000e+00 : f32
      %24 = vector.shape_cast %23 : vector<16x1xi1> to vector<16x1xi1>
      %25 = vector.broadcast %24 : vector<16x1xi1> to vector<16x128xi1>
      %26 = vector.broadcast %cst_7 : f32 to vector<16x128xf32>
      %27 = arith.select %25, %11, %26 : vector<16x128xi1>, vector<16x128xf32>
      %28 = vector.shape_cast %27 : vector<16x128xf32> to vector<2x8x128xf32>
      %cst_8 = arith.constant dense<0.000000e+00> : vector<8x128xf32>
      %29 = vector.multi_reduction <add>, %28, %cst_8 [0] : vector<2x8x128xf32> to vector<8x128xf32>
      %c0_9 = arith.constant 0 : index
      %c0_10 = arith.constant 0 : index
      %30 = vector.load %arg3[%c0_9, %c0_10] : memref<8x128xf32, #tpu.memory_space<vmem>>, vector<8x128xf32>
      tpu.vector_store %arg3[%c0_9, %c0_10], %29 {strides = array<i32>} : memref<8x128xf32, #tpu.memory_space<vmem>>, vector<8x128xf32>,
    } else {
    }
    return
  }
  func.func @transform_0(%arg0: i32) -> (i32, i32) {
    %c0_i32 = arith.constant 0 : i32
    %c0_i32_0 = arith.constant 0 : i32
    return %arg0, %c0_i32 : i32, i32
  }
  func.func @transform_1(%arg0: i32) -> (i32, i32) {
    %c0_i32 = arith.constant 0 : i32
    %c0_i32_0 = arith.constant 0 : i32
    return %arg0, %c0_i32 : i32, i32
  }
  func.func @transform_2(%arg0: i32) -> (i32, i32) {
    %c0_i32 = arith.constant 0 : i32
    %c0_i32_0 = arith.constant 0 : i32
    return %arg0, %c0_i32 : i32, i32
  }
}

</mosaic_0001>

<llo_original>
// kernel: tpu_custom_call.1
$region0: #{tpu_custom_call.1}
  #allocation0 [shape = 'u32[]', space=smem, size = 0x4, offset = 0x4, fixed_abs, tag = 'smem constant byte address 0x4 - core index']
  #allocation1 [shape = 'u32[144,128]{1,0:T(1,128)}', space=vmem, size = 0x12000, scoped, tag = 'internal scratch']
  %s0 = inlined_call_operand.hbm [shape: f32[16,128], index: 0, kind: input, shape index: {}]
  %s1 = inlined_call_operand.hbm [shape: f32[16,128], index: 1, kind: input, shape index: {}]
  %s2 = inlined_call_operand.hbm [shape: f32[8,128], index: 2, kind: output, shape index: {}]
  %s3 = sld [smem:[#allocation0]]
  $region34: #{tpu_custom_call.1} parent=0
    _
  %s5 = ssub.s32 1, %s3
  %s6 = scalar_select 0, %s5, %s3
  $region1: #{tpu_custom_call.1} parent=0
    #allocation2 [shape = 'u8[8192]{0}', space=vmem, size = 0x2000, scoped, tag = 'input window, operand 0, single buffered']
    #allocation3 [shape = 's32[1]{0}', space=sflag, size = 0x4, scoped, tag = 'scoped memory for tpu_custom_call.1']
    #allocation4 [shape = 's32[1]{0}', space=sflag, size = 0x4, scoped, tag = 'scoped memory for tpu_custom_call.1']
    #allocation5 [shape = 'u8[8192]{0}', space=vmem, size = 0x2000, scoped, tag = 'input window, operand 1, single buffered']
    #allocation6 [shape = 's32[1]{0}', space=sflag, size = 0x4, scoped, tag = 'scoped memory for tpu_custom_call.1']
    #allocation7 [shape = 'u8[4096]{0}', space=vmem, size = 0x1000, scoped, tag = 'output window, operand 0, single buffered']
    %7 = vsyncpa [#allocation3], 0
    %8 = vsyncpa [#allocation6], 0
    %9 = vsyncpa [#allocation4], 0
    // Predicated region
    $region2: #{tpu_custom_call.1} parent=1 // pred_check
      _
    $region3: #{tpu_custom_call.1} parent=1 // pred_check_branch
      %11 = sbr.rel (0) target = $region5
    $region4: #{tpu_custom_call.1} parent=1 // pred_region
      %s13 = ssub.s32 256, 256
      %14 = vsyncadd [#allocation3], %s13
      %s15 = sshll.u32 [#allocation2], 4
      %s16 = int_to_ptr.vmem [resolvable:$true] %s15
      %21 = dma.hbm_to_vmem [thread:$0]  %s0, 256, %s16, [#allocation3], 128, 128, 8
    $region5: #{tpu_custom_call.1} parent=1 // pred_fallthru
      _
    // Predicated region
    $region6: #{tpu_custom_call.1} parent=1 // pred_check
      _
    $region7: #{tpu_custom_call.1} parent=1 // pred_check_branch
      %23 = sbr.rel (0) target = $region9
    $region8: #{tpu_custom_call.1} parent=1 // pred_region
      %s25 = ssub.s32 256, 256
      %26 = vsyncadd [#allocation6], %s25
      %s27 = sshll.u32 [#allocation5], 4
      %s28 = int_to_ptr.vmem [resolvable:$true] %s27
      %33 = dma.hbm_to_vmem [thread:$0]  %s1, 256, %s28, [#allocation6], 128, 128, 8
    $region9: #{tpu_custom_call.1} parent=1 // pred_fallthru
      _
    // Predicated region
    $region10: #{tpu_custom_call.1} parent=1 // pred_check
      _
    $region11: #{tpu_custom_call.1} parent=1 // pred_check_branch
      %35 = sbr.rel (0) target = $region13
    $region12: #{tpu_custom_call.1} parent=1 // pred_region
      %36 = dma.done [#allocation3], 256
    $region13: #{tpu_custom_call.1} parent=1 // pred_fallthru
      _
    // Predicated region
    $region14: #{tpu_custom_call.1} parent=1 // pred_check
      _
    $region15: #{tpu_custom_call.1} parent=1 // pred_check_branch
      %38 = sbr.rel (0) target = $region17
    $region16: #{tpu_custom_call.1} parent=1 // pred_region
      %39 = dma.done [#allocation6], 256
    $region17: #{tpu_custom_call.1} parent=1 // pred_fallthru
      _
    %v40 = vld [vmem:[#allocation2] sm:$0xff]
    %v41 = vld [vmem:[#allocation2 + $0x8] sm:$0xff]
    %v42 = vld [vmem:[#allocation5] sm:$0xff]
    %v43 = vld [vmem:[#allocation5 + $0x8] sm:$0xff]
    %v44 = vmax.f32 %v40, 0.0
    %v45 = vmax.f32 %v41, 0.0
    %v46 = vmul.f32 %v40, %v42
    %v47 = vmul.f32 %v41, %v43
    %v48 = vsub.f32 %v44, %v46
    %v49 = vsub.f32 %v45, %v47
    %v50 = vand.u32 2147483647, %v40
    %v51 = vand.u32 2147483647, %v41
    %v52 = vsub.f32 0.0, %v50
    %v53 = vsub.f32 0.0, %v51
    %v54 = vmul.f32 %v52, 1.442695
    %v55 = vpow.pop %v54
    %v56 = vmul.f32 %v53, 1.442695
    %v57 = vpow.pop %v56
    %v58 = vadd.f32 %v55, 1.0
    %v59 = vlog2.pop %v58
    %v60 = vmul.f32 %v59, 0.6931472
    %v61 = vmul.f32 -0.5, %v55
    %v62 = vadd.f32 %v61, 1.0
    %v63 = vmul.f32 %v62, %v55
    %v64 = vand.u32 2147483647, %v55
    %vm65 = vcmp.lt.f32.partialorder %v64, 0.0004427343
    %v66 = vsel %vm65, %v63, %v60
    %v67 = vadd.f32 %v57, 1.0
    %v68 = vlog2.pop %v67
    %v69 = vmul.f32 %v68, 0.6931472
    %v70 = vmul.f32 -0.5, %v57
    %v71 = vadd.f32 %v70, 1.0
    %v72 = vmul.f32 %v71, %v57
    %v73 = vand.u32 2147483647, %v57
    %vm74 = vcmp.lt.f32.partialorder %v73, 0.0004427343
    %v75 = vsel %vm74, %v72, %v69
    %v76 = vadd.f32 %v48, %v66
    %v77 = vadd.f32 %v49, %v75
    %p78 = scmp.eq.s32.totalorder 0, 0
    %p79 = scmp.ne.s32.totalorder 0, 0
    // Predicated region
    $region18: #{tpu_custom_call.1} parent=1 // pred_check
      %p80 = pneg %p79
    $region19: #{tpu_custom_call.1} parent=1 // pred_check_branch
      %82 = sbr.rel (%p80) target = $region21
    $region20: #{tpu_custom_call.1} parent=1 // pred_region
      %v83 = vadd.f32 %v76, %v77
      %84 = vst [vmem:[#allocation7] sm:$0xff] %v83
    $region21: #{tpu_custom_call.1} parent=1 // pred_fallthru
      _
    // Predicated region
    $region22: #{tpu_custom_call.1} parent=1 // pred_check
      %p85 = pneg %p78
    $region23: #{tpu_custom_call.1} parent=1 // pred_check_branch
      %87 = sbr.rel (%p85) target = $region25
    $region24: #{tpu_custom_call.1} parent=1 // pred_region
      %v88 = vlaneseq
      %v89 = vshrl.u32 %v88, 7
      %v90 = vadd.s32 %v89, 8
      %s91 = smul.u32 0, 16
      %v92 = vstv %s91
      %v93 = vadd.s32 %v89, %v92
      %v94 = vadd.s32 %v90, %v92
      %vm95 = vcmp.lt.s32.totalorder %v93, 16
      %vm96 = vcmp.lt.s32.totalorder %v94, 16
      %v97 = vsel %vm95, 1, 0
      %v98 = vsel %vm96, 1, 0
      %vm99 = vcmp.eq.s32.totalorder %v97, 1
      %vm100 = vcmp.eq.s32.totalorder %v98, 1
      %v101 = vsel %vm99, %v76, 0.0
      %v102 = vsel %vm100, %v77, 0.0
      %v103 = vadd.f32 %v101, %v102
      %104 = vst [vmem:[#allocation7] sm:$0xff] %v103
    $region25: #{tpu_custom_call.1} parent=1 // pred_fallthru
      _
    // Predicated region
    $region26: #{tpu_custom_call.1} parent=1 // pred_check
      _
    $region27: #{tpu_custom_call.1} parent=1 // pred_check_branch
      %106 = sbr.rel (0) target = $region29
    $region28: #{tpu_custom_call.1} parent=1 // pred_region
      %s108 = ssub.s32 128, 128
      %109 = vsyncadd [#allocation4], %s108
      %s111 = sshll.u32 [#allocation7], 4
      %s112 = int_to_ptr.vmem [resolvable:$true] %s111
      %114 = dma.vmem_to_hbm [thread:$0]  %s112, 128, %s2, [#allocation4]
    $region29: #{tpu_custom_call.1} parent=1 // pred_fallthru
      _
    // Predicated region
    $region30: #{tpu_custom_call.1} parent=1 // pred_check
      _
    $region31: #{tpu_custom_call.1} parent=1 // pred_check_branch
      %116 = sbr.rel (0) target = $region33
    $region32: #{tpu_custom_call.1} parent=1 // pred_region
      %117 = dma.done [#allocation4], 128
    $region33: #{tpu_custom_call.1} parent=1 // pred_fallthru
      _
    %118 = vsyncpa [#allocation3], 1
    %119 = vsyncpa [#allocation6], 1
    %120 = vsyncpa [#allocation4], 1

</llo_original>
